<compile_context>
chip_gen: v5e
topology: v5e:2x2
jax: 0.10.0
libtpu: 0.0.40
codegen_flags: <defaults>
</compile_context>

<pallas_src>
import math

import jax
import jax.numpy as jnp
from jax.experimental import pallas as pl
from jax.experimental.pallas import tpu as pltpu


_SMALL_TOTAL_BYTES = 1 << 20  # below this, XLA's fused concatenate beats a copy kernel


def _sublane_multiple(itemsize):
    # fp32 -> 8, bf16 -> 16, int8/fp8 -> 32 (sub-32-bit dtypes pack along sublanes).
    return max(8, 32 // int(itemsize))


def _vmem_budgets():
    """Return (combined-input bytes per grid step, vmem_limit_bytes), per generation."""
    try:
        cap = int(pltpu.get_tpu_info().vmem_capacity_bytes)
    except Exception:
        cap = 64 * 1024 * 1024                 # assume the tightest chip (v7x: 64 MiB/TC)
    if cap <= 72 * 1024 * 1024:                # v7x: 2-4 MiB blocks already hit roofline
        return 4 * 1024 * 1024, 36 * 1024 * 1024
    # v5e / v6e: 128 MiB physical VMEM; bigger blocks amortize per-step overhead and
    # lengthen contiguous DMA runs on the strided output writeback.
    return 12 * 1024 * 1024, 64 * 1024 * 1024


def _pick_lane_split(post, sub_mult):
    """Return (R, L) with R*L == post and L % 128 == 0, else None.

    Prefer splits whose R can be tiled in sublane-aligned chunks; otherwise accept any
    128-multiple lane (a block spanning the full R dim is legal regardless of R)."""
    for lane in (1024, 512, 256, 128):
        if post % lane == 0 and (post // lane) >= sub_mult:
            return post // lane, lane
    for lane in (1024, 512, 256, 128):
        if post % lane == 0:
            return post // lane, lane
    return None


def _pick_rows(extent, rows_budget, sub):
    """Row-block size: a multiple of `sub`, or the full extent."""
    if extent <= sub:
        return extent
    return min(extent, max(sub, (rows_budget // sub) * sub))


def _stack_kernel_tiled(*refs):
    """in_i blocks: (TPre, TR, L); out block: (TPre, n, TR, L).  Full-tile stores."""
    *in_refs, out_ref = refs
    for i, r in enumerate(in_refs):
        out_ref[:, i, :, :] = r[...]


def _stack_kernel_ragged(*refs):
    """in_i blocks: (TP, TC); out block: (TP, n, TC).

    Per-input writes are row-aligned (lane offset 0), so only the lane tail of the
    last column block is masked -- no cross-lane rotation on the store path."""
    *in_refs, out_ref = refs
    for i, r in enumerate(in_refs):
        out_ref[:, i, :] = r[...]


def _stack_tiled(flat_inputs, r, lane, per_step_bytes, vmem_limit):
    """Fast path.  flat_inputs: n arrays of shape (pre, post), post == r * lane."""
    n = len(flat_inputs)
    pre, post = flat_inputs[0].shape
    dtype = flat_inputs[0].dtype
    itemsize = jnp.dtype(dtype).itemsize
    sub = _sublane_multiple(itemsize)

    per_input = max(per_step_bytes // n, sub * lane * itemsize)
    rows_budget = max(sub, per_input // (lane * itemsize))
    # Bias toward tr == r (maximally contiguous output writeback) before growing tpre.
    tr = _pick_rows(r, rows_budget, sub)
    tpre = max(1, min(pre, rows_budget // max(tr, 1)))

    nb_pre = pl.cdiv(pre, tpre)
    nb_r = pl.cdiv(r, tr)

    # Megacore (v7x): put the axis with the most blocks outermost so both TensorCores
    # get work even when `pre` is tiny (e.g. pre == 2 -> a single pre block).
    if nb_r >= nb_pre:
        grid = (nb_r, nb_pre)
        in_map = lambda rt, p: (p, rt, 0)
        out_map = lambda rt, p: (p, 0, rt, 0)
    else:
        grid = (nb_pre, nb_r)
        in_map = lambda p, rt: (p, rt, 0)
        out_map = lambda p, rt: (p, 0, rt, 0)

    views = [x.reshape(pre, r, lane) for x in flat_inputs]  # free row-major reshape
    out = pl.pallas_call(
        _stack_kernel_tiled,
        out_shape=jax.ShapeDtypeStruct((pre, n, r, lane), dtype),
        grid=grid,
        in_specs=[pl.BlockSpec((tpre, tr, lane), in_map) for _ in range(n)],
        out_specs=pl.BlockSpec((tpre, n, tr, lane), out_map),
        compiler_params=pltpu.CompilerParams(
            dimension_semantics=("parallel", "parallel"),
            vmem_limit_bytes=vmem_limit),
    )(*views)
    return out.reshape(pre, n, post)


def _stack_ragged(flat_inputs, per_step_bytes, vmem_limit):
    """Ragged-post path.  flat_inputs: n arrays of shape (pre, post), post % 128 != 0."""
    n = len(flat_inputs)
    pre, post = flat_inputs[0].shape
    dtype = flat_inputs[0].dtype
    itemsize = jnp.dtype(dtype).itemsize
    sub = _sublane_multiple(itemsize)

    per_input = max(per_step_bytes // n, sub * min(post, 128) * itemsize)
    # Column tile: multiple of 128 (masked lane tail on the last block), or the full
    # post when it fits -- bounds the working set even for pre small / post huge.
    col_budget = max(1, per_input // (sub * itemsize))
    if post <= 128 or post <= col_budget:
        tc = post
    else:
        tc = max(128, min((col_budget // 128) * 128, (post // 128) * 128))
    rows_budget = max(sub, per_input // (tc * itemsize))
    tp = _pick_rows(pre, rows_budget, sub)

    nb_pre = pl.cdiv(pre, tp)
    nb_c = pl.cdiv(post, tc)

    # Same megacore-friendly ordering as the fast path.
    if nb_c >= nb_pre:
        grid = (nb_c, nb_pre)
        in_map = lambda c, p: (p, c)
        out_map = lambda c, p: (p, 0, c)
    else:
        grid = (nb_pre, nb_c)
        in_map = lambda p, c: (p, c)
        out_map = lambda p, c: (p, 0, c)

    out = pl.pallas_call(
        _stack_kernel_ragged,
        out_shape=jax.ShapeDtypeStruct((pre, n, post), dtype),
        grid=grid,
        in_specs=[pl.BlockSpec((tp, tc), in_map) for _ in range(n)],
        out_specs=pl.BlockSpec((tp, n, tc), out_map),
        compiler_params=pltpu.CompilerParams(
            dimension_semantics=("parallel", "parallel"),
            vmem_limit_bytes=vmem_limit),
    )(*flat_inputs)
    return out


def pallas_stack(tensors, dim, *, small_cutoff_bytes=_SMALL_TOTAL_BYTES):
    """Equivalent of torch.stack(tensors, dim) / torch.cat([t.unsqueeze(dim)...], dim)."""
    tensors = [jnp.asarray(t) for t in tensors]
    if not tensors:
        raise ValueError("torch.stack requires at least one tensor")
    n = len(tensors)
    shape = tensors[0].shape
    dtype = tensors[0].dtype
    for t in tensors[1:]:
        if t.shape != shape or t.dtype != dtype:
            raise ValueError("torch.stack requires tensors of matching shape and dtype")

    rank = len(shape)
    if dim < 0:
        dim += rank + 1
    if not (0 <= dim <= rank):
        raise ValueError(f"stack dim out of range: {dim} for rank {rank}")

    pre = int(math.prod(shape[:dim]))
    post = int(math.prod(shape[dim:]))
    itemsize = int(jnp.dtype(dtype).itemsize)
    out_shape = shape[:dim] + (n,) + shape[dim:]
    total_bytes = n * pre * post * itemsize

    if post == 1 or total_bytes < small_cutoff_bytes:
        # post == 1: trailing-axis stack puts the (tiny) stack dim on the lane axis
        # (width n << 128, fully masked stores) -> let XLA handle that layout.
        # Tiny totals: launch + pipeline prologue dominate and XLA can fuse the concat.
        return jnp.stack(tensors, axis=dim)

    per_step_bytes, vmem_limit = _vmem_budgets()
    sub = _sublane_multiple(itemsize)
    flat = [t.reshape(pre, post) for t in tensors]  # glue: free row-major reshape

    split = _pick_lane_split(post, sub)
    if split is not None:
        r, lane = split
        out = _stack_tiled(flat, r, lane, per_step_bytes, vmem_limit)   # lane-dense path
    else:
        out = _stack_ragged(flat, per_step_bytes, vmem_limit)           # ragged-post path

    # TODO(synk): for very large `post`, an HBM->HBM make_async_copy variant
    # (memory_space=pl.ANY, one strided DMA per input) would skip VMEM staging
    # entirely; kept on the VMEM-staged path here for robustness.
    return out.reshape(out_shape)                    # glue: free row-major reshape


class Model:
    """Mirror of the PyTorch template Model(dim): forward(*v_0) = torch.stack(v_0, dim)."""

    def __init__(self, dim):
        self.dim = dim  # no learnable parameters in the original module

    def __call__(self, *v_0):
        return pallas_stack(v_0, self.dim)


if __name__ == "__main__":
    key = jax.random.PRNGKey(0)
    k0, k1, k2, k3, k4 = jax.random.split(key, 5)

    # --- main demo: small NCHW-shaped inputs, stack on dim=1.  Force the Pallas tiled
    # path (the default dispatch would route a 24 KiB stack to the XLA bypass). ---
    x0 = jax.random.normal(k0, (2, 4, 16, 16), dtype=jnp.float32)
    x1 = jax.random.normal(k1, (2, 4, 16, 16), dtype=jnp.float32)
    x2 = jax.random.normal(k2, (2, 4, 16, 16), dtype=jnp.float32)

    out = jax.block_until_ready(pallas_stack([x0, x1, x2], dim=1, small_cutoff_bytes=0))
    ref = jnp.stack([x0, x1, x2], axis=1)
    assert out.shape == ref.shape == (2, 3, 4, 16, 16)
    assert out.dtype == ref.dtype
    assert bool(jnp.allclose(out, ref))

    # --- Model wrapper with default dispatch (tiny input -> XLA small-size bypass) ---
    model = Model(dim=1)
    out_m = jax.block_until_ready(model(x0, x1, x2))
    assert bool(jnp.allclose(out_m, ref))

    # --- ragged path (post % 128 != 0), forced onto the Pallas kernel ---
    y0 = jax.random.normal(k3, (8, 6, 20), dtype=jnp.float32)
    y1 = jax.random.normal(k4, (8, 6, 20), dtype=jnp.float32)
    out2 = jax.block_until_ready(pallas_stack([y0, y1], dim=2, small_cutoff_bytes=0))
    ref2 = jnp.stack([y0, y1], axis=2)
    assert out2.shape == ref2.shape and bool(jnp.allclose(out2, ref2))

    # --- trailing-axis stack (degenerate post == 1, XLA fallback) ---
    out3 = jax.block_until_ready(Model(dim=-1)(y0, y1))
    ref3 = jnp.stack([y0, y1], axis=-1)
    assert out3.shape == ref3.shape and bool(jnp.allclose(out3, ref3))

    print("KERNEL_OK")
</pallas_src>

<mosaic_0001>
module attributes {stable_mosaic.version = 11 : i64} {
  func.func @_stack_kernel_tiled(%arg0: i32, %arg1: i32, %arg2: memref<2x8x128xf32, #tpu.memory_space<vmem>>, %arg3: memref<2x8x128xf32, #tpu.memory_space<vmem>>, %arg4: memref<2x8x128xf32, #tpu.memory_space<vmem>>, %arg5: memref<2x3x8x128xf32, #tpu.memory_space<vmem>>) attributes {dimension_semantics = [#tpu.dimension_semantics<parallel>, #tpu.dimension_semantics<parallel>], iteration_bounds = array<i64: 1, 1>, scalar_prefetch = 0 : i64, scratch_operands = 0 : i64, tpu.core_type = #tpu.core_type<tc>, window_params = [{transform_indices = @transform_0, window_bounds = array<i64: 2, 8, 128>}, {transform_indices = @transform_1, window_bounds = array<i64: 2, 8, 128>}, {transform_indices = @transform_2, window_bounds = array<i64: 2, 8, 128>}, {transform_indices = @transform_3, window_bounds = array<i64: 2, 3, 8, 128>}]} {
    %c0 = arith.constant 0 : index
    %c0_0 = arith.constant 0 : index
    %c0_1 = arith.constant 0 : index
    %0 = vector.load %arg2[%c0, %c0_0, %c0_1] : memref<2x8x128xf32, #tpu.memory_space<vmem>>, vector<2x8x128xf32>
    %c0_2 = arith.constant 0 : index
    %c0_3 = arith.constant 0 : index
    %c0_4 = arith.constant 0 : index
    %c0_5 = arith.constant 0 : index
    %1 = vector.load %arg5[%c0_2, %c0_3, %c0_4, %c0_5] : memref<2x3x8x128xf32, #tpu.memory_space<vmem>>, vector<2x1x8x128xf32>
    %2 = vector.shape_cast %1 : vector<2x1x8x128xf32> to vector<2x8x128xf32>
    %3 = vector.shape_cast %0 : vector<2x8x128xf32> to vector<2x1x8x128xf32>
    tpu.vector_store %arg5[%c0_2, %c0_3, %c0_4, %c0_5], %3 {strides = array<i32>} : memref<2x3x8x128xf32, #tpu.memory_space<vmem>>, vector<2x1x8x128xf32>,
    %c0_6 = arith.constant 0 : index
    %c0_7 = arith.constant 0 : index
    %c0_8 = arith.constant 0 : index
    %4 = vector.load %arg3[%c0_6, %c0_7, %c0_8] : memref<2x8x128xf32, #tpu.memory_space<vmem>>, vector<2x8x128xf32>
    %c0_9 = arith.constant 0 : index
    %c1 = arith.constant 1 : index
    %c0_10 = arith.constant 0 : index
    %c0_11 = arith.constant 0 : index
    %5 = vector.load %arg5[%c0_9, %c1, %c0_10, %c0_11] : memref<2x3x8x128xf32, #tpu.memory_space<vmem>>, vector<2x1x8x128xf32>
    %6 = vector.shape_cast %5 : vector<2x1x8x128xf32> to vector<2x8x128xf32>
    %7 = vector.shape_cast %4 : vector<2x8x128xf32> to vector<2x1x8x128xf32>
    tpu.vector_store %arg5[%c0_9, %c1, %c0_10, %c0_11], %7 {strides = array<i32>} : memref<2x3x8x128xf32, #tpu.memory_space<vmem>>, vector<2x1x8x128xf32>,
    %c0_12 = arith.constant 0 : index
    %c0_13 = arith.constant 0 : index
    %c0_14 = arith.constant 0 : index
    %8 = vector.load %arg4[%c0_12, %c0_13, %c0_14] : memref<2x8x128xf32, #tpu.memory_space<vmem>>, vector<2x8x128xf32>
    %c0_15 = arith.constant 0 : index
    %c2 = arith.constant 2 : index
    %c0_16 = arith.constant 0 : index
    %c0_17 = arith.constant 0 : index
    %9 = vector.load %arg5[%c0_15, %c2, %c0_16, %c0_17] : memref<2x3x8x128xf32, #tpu.memory_space<vmem>>, vector<2x1x8x128xf32>
    %10 = vector.shape_cast %9 : vector<2x1x8x128xf32> to vector<2x8x128xf32>
    %11 = vector.shape_cast %8 : vector<2x8x128xf32> to vector<2x1x8x128xf32>
    tpu.vector_store %arg5[%c0_15, %c2, %c0_16, %c0_17], %11 {strides = array<i32>} : memref<2x3x8x128xf32, #tpu.memory_space<vmem>>, vector<2x1x8x128xf32>,
    return
  }
  func.func @transform_0(%arg0: i32, %arg1: i32) -> (i32, i32, i32) {
    %c0_i32 = arith.constant 0 : i32
    %c0_i32_0 = arith.constant 0 : i32
    return %arg1, %arg0, %c0_i32 : i32, i32, i32
  }
  func.func @transform_1(%arg0: i32, %arg1: i32) -> (i32, i32, i32) {
    %c0_i32 = arith.constant 0 : i32
    %c0_i32_0 = arith.constant 0 : i32
    return %arg1, %arg0, %c0_i32 : i32, i32, i32
  }
  func.func @transform_2(%arg0: i32, %arg1: i32) -> (i32, i32, i32) {
    %c0_i32 = arith.constant 0 : i32
    %c0_i32_0 = arith.constant 0 : i32
    return %arg1, %arg0, %c0_i32 : i32, i32, i32
  }
  func.func @transform_3(%arg0: i32, %arg1: i32) -> (i32, i32, i32, i32) {
    %c0_i32 = arith.constant 0 : i32
    %c0_i32_0 = arith.constant 0 : i32
    %c0_i32_1 = arith.constant 0 : i32
    return %arg1, %c0_i32, %arg0, %c0_i32_0 : i32, i32, i32, i32
  }
}

</mosaic_0001>

<llo_original>
// kernel: tpu_custom_call.1
$region0: #{tpu_custom_call.1}
  #allocation0 [shape = 'u32[]', space=smem, size = 0x4, offset = 0x4, fixed_abs, tag = 'smem constant byte address 0x4 - core index']
  #allocation1 [shape = 'u32[72,128]{1,0:T(1,128)}', space=vmem, size = 0x9000, scoped, tag = 'internal scratch']
  %s0 = inlined_call_operand.hbm [shape: f32[2,8,128], index: 0, kind: input, shape index: {}]
  %s1 = inlined_call_operand.hbm [shape: f32[2,8,128], index: 1, kind: input, shape index: {}]
  %s2 = inlined_call_operand.hbm [shape: f32[2,8,128], index: 2, kind: input, shape index: {}]
  %s3 = inlined_call_operand.hbm [shape: f32[2,3,8,128], index: 3, kind: output, shape index: {}]
  %s4 = sld [smem:[#allocation0]]
  $region34: #{tpu_custom_call.1} parent=0
    _
  %s6 = ssub.s32 1, %s4
  %s7 = scalar_select 0, %s6, %s4
  $region1: #{tpu_custom_call.1} parent=0
    #allocation2 [shape = 'u8[8192]{0}', space=vmem, size = 0x2000, scoped, tag = 'input window, operand 0, single buffered']
    #allocation3 [shape = 's32[1]{0}', space=sflag, size = 0x4, scoped, tag = 'scoped memory for tpu_custom_call.1']
    #allocation4 [shape = 's32[1]{0}', space=sflag, size = 0x4, scoped, tag = 'scoped memory for tpu_custom_call.1']
    #allocation5 [shape = 'u8[8192]{0}', space=vmem, size = 0x2000, scoped, tag = 'input window, operand 1, single buffered']
    #allocation6 [shape = 's32[1]{0}', space=sflag, size = 0x4, scoped, tag = 'scoped memory for tpu_custom_call.1']
    #allocation7 [shape = 'u8[8192]{0}', space=vmem, size = 0x2000, scoped, tag = 'input window, operand 2, single buffered']
    #allocation8 [shape = 'u8[24576]{0}', space=vmem, size = 0x6000, scoped, tag = 'output window, operand 0, single buffered']
    %8 = vsyncpa [#allocation3], 0
    %9 = vsyncpa [#allocation6], 0
    %10 = vsyncpa [#allocation4], 0
    // Predicated region
    $region2: #{tpu_custom_call.1} parent=1 // pred_check
      _
    $region3: #{tpu_custom_call.1} parent=1 // pred_check_branch
      %12 = sbr.rel (0) target = $region5
    $region4: #{tpu_custom_call.1} parent=1 // pred_region
      %14 = vsyncadd [#allocation3], 0
      %s15 = sshll.u32 %s0, 4
      %s16 = int_to_ptr.hbm [resolvable:$true] %s15
      %s17 = sshll.u32 [#allocation2], 4
      %s18 = int_to_ptr.vmem [resolvable:$true] %s17
      %23 = dma.hbm_to_vmem [thread:$0]  %s16, 256, %s18, [#allocation3], 128, 128, 8
    $region5: #{tpu_custom_call.1} parent=1 // pred_fallthru
      _
    // Predicated region
    $region6: #{tpu_custom_call.1} parent=1 // pred_check
      _
    $region7: #{tpu_custom_call.1} parent=1 // pred_check_branch
      %25 = sbr.rel (0) target = $region9
    $region8: #{tpu_custom_call.1} parent=1 // pred_region
      %27 = vsyncadd [#allocation6], 0
      %s28 = sshll.u32 %s1, 4
      %s29 = int_to_ptr.hbm [resolvable:$true] %s28
      %s30 = sshll.u32 [#allocation5], 4
      %s31 = int_to_ptr.vmem [resolvable:$true] %s30
      %36 = dma.hbm_to_vmem [thread:$0]  %s29, 256, %s31, [#allocation6], 128, 128, 8
    $region9: #{tpu_custom_call.1} parent=1 // pred_fallthru
      _
    // Predicated region
    $region10: #{tpu_custom_call.1} parent=1 // pred_check
      _
    $region11: #{tpu_custom_call.1} parent=1 // pred_check_branch
      %38 = sbr.rel (0) target = $region13
    $region12: #{tpu_custom_call.1} parent=1 // pred_region
      %40 = vsyncadd [#allocation6], 0
      %s41 = sshll.u32 %s2, 4
      %s42 = int_to_ptr.hbm [resolvable:$true] %s41
      %s43 = sshll.u32 [#allocation7], 4
      %s44 = int_to_ptr.vmem [resolvable:$true] %s43
      %49 = dma.hbm_to_vmem [thread:$0]  %s42, 256, %s44, [#allocation6], 128, 128, 8
    $region13: #{tpu_custom_call.1} parent=1 // pred_fallthru
      _
    // Predicated region
    $region14: #{tpu_custom_call.1} parent=1 // pred_check
      _
    $region15: #{tpu_custom_call.1} parent=1 // pred_check_branch
      %51 = sbr.rel (0) target = $region17
    $region16: #{tpu_custom_call.1} parent=1 // pred_region
      %53 = dma.done [#allocation3], 256
    $region17: #{tpu_custom_call.1} parent=1 // pred_fallthru
      _
    // Predicated region
    $region18: #{tpu_custom_call.1} parent=1 // pred_check
      _
    $region19: #{tpu_custom_call.1} parent=1 // pred_check_branch
      %55 = sbr.rel (0) target = $region21
    $region20: #{tpu_custom_call.1} parent=1 // pred_region
      %57 = dma.done [#allocation6], 256
    $region21: #{tpu_custom_call.1} parent=1 // pred_fallthru
      _
    // Predicated region
    $region22: #{tpu_custom_call.1} parent=1 // pred_check
      _
    $region23: #{tpu_custom_call.1} parent=1 // pred_check_branch
      %59 = sbr.rel (0) target = $region25
    $region24: #{tpu_custom_call.1} parent=1 // pred_region
      %61 = dma.done [#allocation6], 256
    $region25: #{tpu_custom_call.1} parent=1 // pred_fallthru
      _
    %v62 = vld [vmem:[#allocation2] sm:$0xff]
    %v63 = vld [vmem:[#allocation2 + $0x8] sm:$0xff]
    %64 = vst [vmem:[#allocation8] sm:$0xff] %v62
    %65 = vst [vmem:[#allocation8 + $0x18] sm:$0xff] %v63
    %v66 = vld [vmem:[#allocation5] sm:$0xff]
    %v67 = vld [vmem:[#allocation5 + $0x8] sm:$0xff]
    %s68 = scalar_lea.vmem [#allocation8], 8
    %69 = vst [vmem:[%s68] sm:$0xff] %v66
    %70 = vst [vmem:[%s68 + $0x18] sm:$0xff] %v67
    %v71 = vld [vmem:[#allocation7] sm:$0xff]
    %v72 = vld [vmem:[#allocation7 + $0x8] sm:$0xff]
    %s73 = scalar_lea.vmem [#allocation8], 16
    %74 = vst [vmem:[%s73] sm:$0xff] %v71
    %75 = vst [vmem:[%s73 + $0x18] sm:$0xff] %v72
    // Predicated region
    $region26: #{tpu_custom_call.1} parent=1 // pred_check
      _
    $region27: #{tpu_custom_call.1} parent=1 // pred_check_branch
      %77 = sbr.rel (0) target = $region29
    $region28: #{tpu_custom_call.1} parent=1 // pred_region
      %79 = vsyncadd [#allocation4], 0
      %s80 = sshll.u32 [#allocation8], 4
      %s81 = int_to_ptr.vmem [resolvable:$true] %s80
      %s82 = sshll.u32 %s3, 4
      %s83 = int_to_ptr.hbm [resolvable:$true] %s82
      %88 = dma.vmem_to_hbm [thread:$0]  %s81, 768, %s83, [#allocation4], 128, 128, 8
    $region29: #{tpu_custom_call.1} parent=1 // pred_fallthru
      _
    // Predicated region
    $region30: #{tpu_custom_call.1} parent=1 // pred_check
      _
    $region31: #{tpu_custom_call.1} parent=1 // pred_check_branch
      %90 = sbr.rel (0) target = $region33
    $region32: #{tpu_custom_call.1} parent=1 // pred_region
      %92 = dma.done [#allocation4], 768
    $region33: #{tpu_custom_call.1} parent=1 // pred_fallthru
      _
    %93 = vsyncpa [#allocation3], 1
    %94 = vsyncpa [#allocation6], 1
    %95 = vsyncpa [#allocation4], 1

</llo_original>
